<compile_context>
chip_gen: v6e
topology: v6e:2x2x1
jax: 0.10.0
libtpu: 0.0.40
codegen_flags: <defaults>
</compile_context>

<pallas_src>
import functools

import jax
import jax.numpy as jnp
from jax.experimental import pallas as pl
from jax.experimental.pallas import tpu as pltpu

EPS = 1e-5
LANE = 128


def _round_up(n, m):
    return (n + m - 1) // m * m


def _sublane(dtype):
    # sublane packing: f32 -> 8, bf16 -> 16, int8/fp8 -> 32
    return max(8, 32 // jnp.dtype(dtype).itemsize)


def _vmem_budget_bytes():
    try:
        cap = int(pltpu.get_tpu_info().vmem_capacity_bytes)
    except Exception:
        cap = 128 << 20
    # leave headroom for compiler internal scratch / semaphores
    return max(32 << 20, min(cap * 3 // 4, 100 << 20))


def _mlp_block_kernel(x_ref, wa_ref, wb_ref, wp_ref, o_ref, xn_ref, acc_ref,
                      *, c_actual):
    # x_ref: (tm, Cp); wa/wb_ref: (Cp, tec); wp_ref: (tec, Cp)
    # xn_ref: (tm, Cp) matmul dtype; acc_ref: (tm, Cp) f32
    j = pl.program_id(1)

    @pl.when(j == 0)
    def _():
        # LayerNorm (weight-only, biased variance) in f32, single fused pass.
        # Zero-padded lanes contribute zero to both sums; gamma is pre-folded
        # into wa/wb and padded weight rows/cols are zero, so no lane mask is
        # needed anywhere and padded output lanes come out zero.
        xf = x_ref[...].astype(jnp.float32)
        inv_c = jnp.float32(1.0 / c_actual)
        mean = jnp.sum(xf, axis=-1, keepdims=True) * inv_c
        ex2 = jnp.sum(xf * xf, axis=-1, keepdims=True) * inv_c
        var = ex2 - mean * mean
        xn_ref[...] = ((xf - mean) * jax.lax.rsqrt(var + EPS)).astype(xn_ref.dtype)
        acc_ref[...] = jnp.zeros_like(acc_ref)

    # Stream over the expansion dim: two lane-dense (tm, tec) dots, SiGLU in
    # f32, then accumulate the projection back into the f32 (tm, Cp) scratch.
    xn = xn_ref[...]
    a = jnp.dot(xn, wa_ref[...], preferred_element_type=jnp.float32)
    b = jnp.dot(xn, wb_ref[...], preferred_element_type=jnp.float32)
    # NOTE: gated is cast to the weight dtype for the MXU (f32 here; bf16 if
    # params were prepared in bf16) — accumulation stays f32.
    gated = (a * (b * jax.nn.sigmoid(b))).astype(wp_ref.dtype)
    acc_ref[...] += jnp.dot(gated, wp_ref[...], preferred_element_type=jnp.float32)

    @pl.when(j == pl.num_programs(1) - 1)
    def _():
        # Residual add with the pre-norm input, then writeback.
        o_ref[...] = (acc_ref[...] + x_ref[...].astype(jnp.float32)).astype(o_ref.dtype)


def prepare_mlp_params(ln_weight, w_expand, w_project, param_dtype=None):
    """One-time weight prep — call OUTSIDE the hot path.

    ln_weight: (C,); w_expand: (C, 2*E*C) pre-transposed (in, out), SiGLU halves
    laid out as columns [a | b]; w_project: (E*C, C) pre-transposed (in, out).

    gamma is folded into the expand weights (this LN has no bias), halves are
    split, and everything is zero-padded to lane multiples.  Pass
    param_dtype=jnp.bfloat16 to run the MXU in bf16 (f32 accumulation is kept
    inside the kernel)."""
    C = ln_weight.shape[0]
    EC = w_project.shape[0]
    assert w_expand.shape == (C, 2 * EC)
    assert w_project.shape == (EC, C)
    dt = jnp.dtype(param_dtype) if param_dtype is not None else w_expand.dtype

    g = ln_weight.astype(jnp.float32)[:, None]
    wa = (g * w_expand[:, :EC].astype(jnp.float32)).astype(dt)
    wb = (g * w_expand[:, EC:].astype(jnp.float32)).astype(dt)
    wp = w_project.astype(dt)

    Cp = _round_up(C, LANE)
    ECp = _round_up(EC, LANE)
    wa_p = jnp.pad(wa, ((0, Cp - C), (0, ECp - EC)))
    wb_p = jnp.pad(wb, ((0, Cp - C), (0, ECp - EC)))
    wp_p = jnp.pad(wp, ((0, ECp - EC), (0, Cp - C)))
    return wa_p, wb_p, wp_p


@functools.partial(jax.jit, static_argnames=("tm",))
def mlp_block_apply(x, wa_p, wb_p, wp_p, *, tm=None):
    """x: (..., C); wa_p/wb_p: (Cp, ECp); wp_p: (ECp, Cp) from prepare_mlp_params."""
    orig_shape = x.shape
    C = orig_shape[-1]
    Cp, ECp = wa_p.shape
    assert Cp == _round_up(C, LANE) and wp_p.shape == (ECp, Cp)

    x2 = x.reshape(-1, C)
    T = x2.shape[0]

    x_isz = jnp.dtype(x.dtype).itemsize
    w_isz = jnp.dtype(wa_p.dtype).itemsize
    sub = _sublane(x.dtype)
    budget = _vmem_budget_bytes()

    # ---- token tile ---------------------------------------------------------
    tm_target = tm if tm is not None else (512 if budget >= (80 << 20) else 256)
    tm_target = max(sub, _round_up(tm_target, sub))

    def _fixed_bytes(t):
        # double-buffered x & out tiles + xn / acc scratches
        return 4 * t * Cp * x_isz + t * Cp * (w_isz + 4)

    while tm_target > 2 * sub and _fixed_bytes(tm_target) > budget // 2:
        tm_target = max(sub, _round_up(tm_target // 2, sub))

    n_tok = max(pl.cdiv(T, tm_target), 1)
    if n_tok < 2 and T > sub:
        n_tok = 2  # give both v7x TensorCores work on the "parallel" axis
    tm_eff = _round_up(pl.cdiv(T, n_tok), sub)  # minimizes last-tile padding
    Tp = tm_eff * n_tok

    # ---- expansion tile -----------------------------------------------------
    rem = max(budget - _fixed_bytes(tm_eff), 0)
    tec = LANE
    for cand in (512, 384, 256):
        # double-buffered wa/wb/wp tiles + (tm, tec) f32 intermediates
        if ECp % cand == 0 and (6 * Cp * cand * w_isz + 3 * tm_eff * cand * 4) <= rem:
            tec = cand
            break
    n_ec = ECp // tec

    # ---- pad activations (no-op when already aligned) -----------------------
    if (Tp, Cp) != (T, C):
        x_p = jnp.pad(x2, ((0, Tp - T), (0, Cp - C)))
    else:
        x_p = x2

    cost = pl.CostEstimate(
        flops=6 * Tp * Cp * ECp,                         # expand (2 halves) + project
        transcendentals=Tp * ECp,                        # sigmoid
        bytes_accessed=2 * Tp * Cp * x_isz + 3 * Cp * ECp * w_isz,
    )

    kernel = functools.partial(_mlp_block_kernel, c_actual=C)

    out = pl.pallas_call(
        kernel,
        out_shape=jax.ShapeDtypeStruct((Tp, Cp), x.dtype),
        grid_spec=pltpu.PrefetchScalarGridSpec(
            num_scalar_prefetch=0,
            grid=(n_tok, n_ec),
            in_specs=[
                pl.BlockSpec((tm_eff, Cp), lambda i, j: (i, 0)),   # x
                pl.BlockSpec((Cp, tec), lambda i, j: (0, j)),      # W_a (gamma folded)
                pl.BlockSpec((Cp, tec), lambda i, j: (0, j)),      # W_b (gamma folded)
                pl.BlockSpec((tec, Cp), lambda i, j: (j, 0)),      # W_proj
            ],
            out_specs=pl.BlockSpec((tm_eff, Cp), lambda i, j: (i, 0)),
            scratch_shapes=[
                pltpu.VMEM((tm_eff, Cp), wa_p.dtype),   # normalized x (matmul dtype)
                pltpu.VMEM((tm_eff, Cp), jnp.float32),  # projection accumulator
            ],
        ),
        compiler_params=pltpu.CompilerParams(
            dimension_semantics=("parallel", "arbitrary"),
            vmem_limit_bytes=budget,
        ),
        cost_estimate=cost,
    )(x_p, wa_p, wb_p, wp_p)

    if (Tp, Cp) != (T, C):
        out = out[:T, :C]
    return out.reshape(orig_shape)


def mlp_block(x, ln_weight, w_expand, w_project, *, param_dtype=None, tm=None):
    """Convenience one-shot wrapper.  In a real model call prepare_mlp_params
    once and reuse its outputs with mlp_block_apply."""
    wa_p, wb_p, wp_p = prepare_mlp_params(ln_weight, w_expand, w_project, param_dtype)
    return mlp_block_apply(x, wa_p, wb_p, wp_p, tm=tm)


def _reference(x, ln_weight, w_expand, w_project):
    xf = x.astype(jnp.float32)
    mean = jnp.mean(xf, axis=-1, keepdims=True)
    var = jnp.mean((xf - mean) ** 2, axis=-1, keepdims=True)
    xn = (xf - mean) * jax.lax.rsqrt(var + EPS) * ln_weight
    h = xn @ w_expand.astype(jnp.float32)
    half = h.shape[-1] // 2
    a, b = h[..., :half], h[..., half:]
    y = (a * (b * jax.nn.sigmoid(b))) @ w_project.astype(jnp.float32)
    return (y + xf).astype(x.dtype)


if __name__ == "__main__":
    # Small shapes: batch=2, seq=8, num_channels=32, expansion_factor=3
    batch, seq, C, E = 2, 8, 32, 3

    key = jax.random.PRNGKey(0)
    kx, ke, kp = jax.random.split(key, 3)

    x = jax.random.normal(kx, (batch, seq, C), dtype=jnp.float32)

    # Module __init__ shapes: LayerNorm weight ones(C); expand Linear(C, 2*E*C,
    # bias=False); project Linear(E*C, C, bias=False).  Stored (in, out).
    ln_weight = jnp.ones((C,), dtype=jnp.float32)
    w_expand = jax.random.normal(ke, (C, 2 * E * C), dtype=jnp.float32) * 0.05
    w_project = jax.random.normal(kp, (E * C, C), dtype=jnp.float32) * 0.05

    wa_p, wb_p, wp_p = prepare_mlp_params(ln_weight, w_expand, w_project)
    out = mlp_block_apply(x, wa_p, wb_p, wp_p)
    out = jax.block_until_ready(out)

    ref = _reference(x, ln_weight, w_expand, w_project)
    assert out.shape == x.shape
    assert jnp.allclose(out, ref, atol=1e-4, rtol=1e-4), "mismatch vs reference"

    print("KERNEL_OK")
</pallas_src>

<mosaic_0001>
module attributes {stable_mosaic.version = 11 : i64} {
  func.func @_mlp_block_kernel(%arg0: i32, %arg1: i32, %arg2: memref<8x128xf32, #tpu.memory_space<vmem>>, %arg3: memref<128x128xf32, #tpu.memory_space<vmem>>, %arg4: memref<128x128xf32, #tpu.memory_space<vmem>>, %arg5: memref<128x128xf32, #tpu.memory_space<vmem>>, %arg6: memref<8x128xf32, #tpu.memory_space<vmem>>, %arg7: memref<8x128xf32, #tpu.memory_space<vmem>>, %arg8: memref<8x128xf32, #tpu.memory_space<vmem>>) attributes {dimension_semantics = [#tpu.dimension_semantics<parallel>, #tpu.dimension_semantics<arbitrary>], iteration_bounds = array<i64: 2, 1>, scalar_prefetch = 0 : i64, scratch_operands = 2 : i64, tpu.core_type = #tpu.core_type<tc>, window_params = [{transform_indices = @transform_0, window_bounds = array<i64: 8, 128>}, {transform_indices = @transform_1, window_bounds = array<i64: 128, 128>}, {transform_indices = @transform_2, window_bounds = array<i64: 128, 128>}, {transform_indices = @transform_3, window_bounds = array<i64: 128, 128>}, {transform_indices = @transform_4, window_bounds = array<i64: 8, 128>}]} {
    %c0_i32 = arith.constant 0 : i32
    %0 = arith.cmpi eq, %arg1, %c0_i32 : i32
    %1 = arith.extui %0 : i1 to i32
    %c0_i32_0 = arith.constant 0 : i32
    %2 = arith.cmpi ne, %1, %c0_i32_0 : i32
    scf.if %2 {
      %c0_17 = arith.constant 0 : index
      %c0_18 = arith.constant 0 : index
      %23 = vector.load %arg2[%c0_17, %c0_18] : memref<8x128xf32, #tpu.memory_space<vmem>>, vector<8x128xf32>
      %cst_19 = arith.constant dense<0.000000e+00> : vector<8xf32>
      %24 = vector.multi_reduction <add>, %23, %cst_19 [1] : vector<8x128xf32> to vector<8xf32>
      %25 = vector.shape_cast %24 : vector<8xf32> to vector<8x1xf32>
      %cst_20 = arith.constant 3.125000e-02 : f32
      %26 = vector.broadcast %cst_20 : f32 to vector<8x1xf32>
      %27 = arith.mulf %25, %26 : vector<8x1xf32>
      %28 = arith.mulf %23, %23 : vector<8x128xf32>
      %cst_21 = arith.constant dense<0.000000e+00> : vector<8xf32>
      %29 = vector.multi_reduction <add>, %28, %cst_21 [1] : vector<8x128xf32> to vector<8xf32>
      %30 = vector.shape_cast %29 : vector<8xf32> to vector<8x1xf32>
      %cst_22 = arith.constant 3.125000e-02 : f32
      %31 = vector.broadcast %cst_22 : f32 to vector<8x1xf32>
      %32 = arith.mulf %30, %31 : vector<8x1xf32>
      %33 = arith.mulf %27, %27 : vector<8x1xf32>
      %34 = arith.subf %32, %33 : vector<8x1xf32>
      %35 = vector.broadcast %27 : vector<8x1xf32> to vector<8x128xf32>
      %36 = arith.subf %23, %35 : vector<8x128xf32>
      %cst_23 = arith.constant 9.99999974E-6 : f32
      %37 = vector.broadcast %cst_23 : f32 to vector<8x1xf32>
      %38 = arith.addf %34, %37 : vector<8x1xf32>
      %39 = math.rsqrt %38 : vector<8x1xf32>
      %40 = vector.broadcast %39 : vector<8x1xf32> to vector<8x128xf32>
      %41 = arith.mulf %36, %40 : vector<8x128xf32>
      %c0_24 = arith.constant 0 : index
      %c0_25 = arith.constant 0 : index
      %42 = vector.load %arg7[%c0_24, %c0_25] : memref<8x128xf32, #tpu.memory_space<vmem>>, vector<8x128xf32>
      tpu.vector_store %arg7[%c0_24, %c0_25], %41 {strides = array<i32>} : memref<8x128xf32, #tpu.memory_space<vmem>>, vector<8x128xf32>,
      %cst_26 = arith.constant 0.000000e+00 : f32
      %43 = vector.broadcast %cst_26 : f32 to vector<8x128xf32>
      %c0_27 = arith.constant 0 : index
      %c0_28 = arith.constant 0 : index
      %44 = vector.load %arg8[%c0_27, %c0_28] : memref<8x128xf32, #tpu.memory_space<vmem>>, vector<8x128xf32>
      tpu.vector_store %arg8[%c0_27, %c0_28], %43 {strides = array<i32>} : memref<8x128xf32, #tpu.memory_space<vmem>>, vector<8x128xf32>,
    } else {
    }
    %c0 = arith.constant 0 : index
    %c0_1 = arith.constant 0 : index
    %3 = vector.load %arg7[%c0, %c0_1] : memref<8x128xf32, #tpu.memory_space<vmem>>, vector<8x128xf32>
    %c0_2 = arith.constant 0 : index
    %c0_3 = arith.constant 0 : index
    %4 = vector.load %arg3[%c0_2, %c0_3] : memref<128x128xf32, #tpu.memory_space<vmem>>, vector<128x128xf32>
    %cst = arith.constant dense<0.000000e+00> : vector<8x128xf32>
    %5 = tpu.matmul %3, %4, %cst {dimension_numbers = #tpu.dot_dimension_numbers<[1], [0], [0], [1], [0, 0, 1, 1], [], []>} : vector<8x128xf32>, vector<128x128xf32>, vector<8x128xf32> -> vector<8x128xf32>
    %c0_4 = arith.constant 0 : index
    %c0_5 = arith.constant 0 : index
    %6 = vector.load %arg4[%c0_4, %c0_5] : memref<128x128xf32, #tpu.memory_space<vmem>>, vector<128x128xf32>
    %cst_6 = arith.constant dense<0.000000e+00> : vector<8x128xf32>
    %7 = tpu.matmul %3, %6, %cst_6 {dimension_numbers = #tpu.dot_dimension_numbers<[1], [0], [0], [1], [0, 0, 1, 1], [], []>} : vector<8x128xf32>, vector<128x128xf32>, vector<8x128xf32> -> vector<8x128xf32>
    %8 = arith.negf %7 : vector<8x128xf32>
    %9 = math.exp %8 : vector<8x128xf32>
    %cst_7 = arith.constant 1.000000e+00 : f32
    %10 = vector.broadcast %cst_7 : f32 to vector<8x128xf32>
    %11 = arith.addf %10, %9 : vector<8x128xf32>
    %12 = arith.divf %10, %11 : vector<8x128xf32>
    %13 = arith.mulf %7, %12 : vector<8x128xf32>
    %14 = arith.mulf %5, %13 : vector<8x128xf32>
    %c0_8 = arith.constant 0 : index
    %c0_9 = arith.constant 0 : index
    %15 = vector.load %arg8[%c0_8, %c0_9] : memref<8x128xf32, #tpu.memory_space<vmem>>, vector<8x128xf32>
    %c0_10 = arith.constant 0 : index
    %c0_11 = arith.constant 0 : index
    %16 = vector.load %arg5[%c0_10, %c0_11] : memref<128x128xf32, #tpu.memory_space<vmem>>, vector<128x128xf32>
    %cst_12 = arith.constant dense<0.000000e+00> : vector<8x128xf32>
    %17 = tpu.matmul %14, %16, %cst_12 {dimension_numbers = #tpu.dot_dimension_numbers<[1], [0], [0], [1], [0, 0, 1, 1], [], []>} : vector<8x128xf32>, vector<128x128xf32>, vector<8x128xf32> -> vector<8x128xf32>
    %18 = arith.addf %15, %17 : vector<8x128xf32>
    %c0_13 = arith.constant 0 : index
    %c0_14 = arith.constant 0 : index
    %19 = vector.load %arg8[%c0_13, %c0_14] : memref<8x128xf32, #tpu.memory_space<vmem>>, vector<8x128xf32>
    tpu.vector_store %arg8[%c0_13, %c0_14], %18 {strides = array<i32>} : memref<8x128xf32, #tpu.memory_space<vmem>>, vector<8x128xf32>,
    %c0_i32_15 = arith.constant 0 : i32
    %20 = arith.cmpi eq, %arg1, %c0_i32_15 : i32
    %21 = arith.extui %20 : i1 to i32
    %c0_i32_16 = arith.constant 0 : i32
    %22 = arith.cmpi ne, %21, %c0_i32_16 : i32
    scf.if %22 {
      %c0_17 = arith.constant 0 : index
      %c0_18 = arith.constant 0 : index
      %23 = vector.load %arg8[%c0_17, %c0_18] : memref<8x128xf32, #tpu.memory_space<vmem>>, vector<8x128xf32>
      %c0_19 = arith.constant 0 : index
      %c0_20 = arith.constant 0 : index
      %24 = vector.load %arg2[%c0_19, %c0_20] : memref<8x128xf32, #tpu.memory_space<vmem>>, vector<8x128xf32>
      %25 = arith.addf %23, %24 : vector<8x128xf32>
      %c0_21 = arith.constant 0 : index
      %c0_22 = arith.constant 0 : index
      %26 = vector.load %arg6[%c0_21, %c0_22] : memref<8x128xf32, #tpu.memory_space<vmem>>, vector<8x128xf32>
      tpu.vector_store %arg6[%c0_21, %c0_22], %25 {strides = array<i32>} : memref<8x128xf32, #tpu.memory_space<vmem>>, vector<8x128xf32>,
    } else {
    }
    return
  }
  func.func @transform_0(%arg0: i32, %arg1: i32) -> (i32, i32) {
    %c0_i32 = arith.constant 0 : i32
    %c0_i32_0 = arith.constant 0 : i32
    return %arg0, %c0_i32 : i32, i32
  }
  func.func @transform_1(%arg0: i32, %arg1: i32) -> (i32, i32) {
    %c0_i32 = arith.constant 0 : i32
    %c0_i32_0 = arith.constant 0 : i32
    return %c0_i32, %arg1 : i32, i32
  }
  func.func @transform_2(%arg0: i32, %arg1: i32) -> (i32, i32) {
    %c0_i32 = arith.constant 0 : i32
    %c0_i32_0 = arith.constant 0 : i32
    return %c0_i32, %arg1 : i32, i32
  }
  func.func @transform_3(%arg0: i32, %arg1: i32) -> (i32, i32) {
    %c0_i32 = arith.constant 0 : i32
    %c0_i32_0 = arith.constant 0 : i32
    return %arg1, %c0_i32 : i32, i32
  }
  func.func @transform_4(%arg0: i32, %arg1: i32) -> (i32, i32) {
    %c0_i32 = arith.constant 0 : i32
    %c0_i32_0 = arith.constant 0 : i32
    return %arg0, %c0_i32 : i32, i32
  }
}

</mosaic_0001>

<llo_original>
// kernel: mlp_block_apply.1
$region0: #{mlp_block_apply.1}
  #allocation0 [shape = 'u32[]', space=smem, size = 0x4, offset = 0x4, fixed_abs, tag = 'smem constant byte address 0x4 - core index']
  #allocation1 [shape = 'u32[144,128]{1,0:T(1,128)}', space=vmem, size = 0x12000, scoped, tag = 'internal scratch']
  #allocation2 [shape = 'f32[8,128]{1,0:T(8,128)}', space=vmem, size = 0x1000, scoped, tag = 'scratch operand']
  #allocation3 [shape = 'f32[8,128]{1,0:T(8,128)}', space=vmem, size = 0x1000, scoped, tag = 'scratch operand']
  %s0 = inlined_call_operand.vmem [shape: f32[16,128], index: 0, kind: input, shape index: {}]
  %s1 = inlined_call_operand.hbm [shape: f32[128,128], index: 1, kind: input, shape index: {}]
  %s2 = inlined_call_operand.hbm [shape: f32[128,128], index: 2, kind: input, shape index: {}]
  %s3 = inlined_call_operand.hbm [shape: f32[128,128], index: 3, kind: input, shape index: {}]
  %s4 = inlined_call_operand.vmem [shape: f32[16,128], index: 4, kind: output, shape index: {}]
  %s5 = sld [smem:[#allocation0]]
  $region69: #{mlp_block_apply.1} parent=0
    _
  %s7 = ssub.s32 1, %s5
  %s8 = scalar_select 0, %s7, %s5
  $region1: #{mlp_block_apply.1} parent=0
    #allocation4 [shape = 'u8[65536]{0}', space=vmem, size = 0x10000, scoped, tag = 'input window, operand 1, single buffered']
    #allocation5 [shape = 's32[2]{0}', space=sflag, size = 0x8, scoped, tag = 'scoped memory for mlp_block_apply.1']
    #allocation6 [shape = 'u8[65536]{0}', space=vmem, size = 0x10000, scoped, tag = 'input window, operand 2, single buffered']
    #allocation7 [shape = 's32[1]{0}', space=sflag, size = 0x4, scoped, tag = 'scoped memory for mlp_block_apply.1']
    #allocation8 [shape = 'u8[65536]{0}', space=vmem, size = 0x10000, scoped, tag = 'input window, operand 3, single buffered']
    %9 = vsyncpa [#allocation5], 0
    %10 = vsyncpa [#allocation7], 0
    loop: start=0, step=1, limit=4
    $region2: #{mlp_block_apply.1} parent=1 // loop_pre_header
      _
    $region3: #{mlp_block_apply.1} parent=1 // loop_header
      %s12 = sphi 0, %s16
      %p13 = scmp.ge.s32.totalorder %s12, 4
      %s19 = sphi 0, %s31
      %s20 = sphi 0, %s27
      %s21 = sphi 0, %s19
      %s22 = sphi 0, %s20
      %s23 = sphi 0, %s21
      %s24 = sphi 0, %s22
      %s34 = sphi 0, %s36
      %s37 = sphi 0, %s34
      %s38 = sphi 0, %s37
      %s54 = sphi 0, %s38
      %s60 = sphi 0, %s62
      %s63 = sphi 0, %s60
      %s64 = sphi 0, %s63
      %s80 = sphi 0, %s64
      %s86 = sphi 0, %s88
      %s89 = sphi 0, %s86
      %s90 = sphi 0, %s89
      %s106 = sphi 0, %s90
      %s112 = sphi 0, %s114
      %s115 = sphi 0, %s112
      %s116 = sphi 0, %s115
      %s132 = sphi 0, %s116
      %s138 = sphi 0, %s140
      %s141 = sphi 0, %s138
      %s142 = sphi 0, %s141
      %s158 = sphi 0, %s142
    $region4: #{mlp_block_apply.1} parent=1 // loop_header_branch
      %15 = sbr.rel (%p13) target = $region8
    $region5: #{mlp_block_apply.1} parent=1 // loop_body
      %s17 = ssub.s32 %s12, 1
      %s18 = ssub.s32 %s12, 2
      %s25 = sadd.s32 1, %s20
      %p26 = scmp.ge.s32.totalorder %s25, 1
      %s27 = scalar_select %p26, 0, %s25
      %s28 = sadd.s32 1, %s19
      %s29 = scalar_select %p26, %s28, %s19
      %p30 = scmp.ge.s32.totalorder %s29, 2
      %s31 = scalar_select %p30, 0, %s29
      %s32 = ssub.s32 %s19, %s31
      %p33 = scmp.eq.s32.totalorder %s32, 0
      %s35 = sadd.s32 %s34, 1
      %s36 = scalar_select %p33, %s34, %s35
      %p39 = pneg %p33
      %p40 = scmp.eq.s32.totalorder %s12, 1
      %p41 = por %p39, %p40
      %p42 = scmp.ne.s32.totalorder %s34, %s37
      %p43 = scmp.eq.s32.totalorder %s12, 0
      %p44 = por %p42, %p43
      %p45 = scmp.ne.s32.totalorder %s34, %s37
      %p46 = scmp.eq.s32.totalorder %s17, 1
      %p47 = por %p45, %p46
      %p48 = scmp.ne.s32.totalorder %s37, %s38
      %p49 = scmp.eq.s32.totalorder %s17, 0
      %p50 = por %p48, %p49
      %p51 = scmp.ne.s32.totalorder %s37, %s38
      %p52 = scmp.eq.s32.totalorder %s18, 1
      %p53 = por %p51, %p52
      %p55 = scmp.ne.s32.totalorder %s38, %s54
      %p56 = scmp.eq.s32.totalorder %s18, 0
      %p57 = por %p55, %p56
      %s58 = ssub.s32 %s20, %s27
      %p59 = scmp.eq.s32.totalorder %s58, 0
      %s61 = sadd.s32 %s60, 1
      %s62 = scalar_select %p59, %s60, %s61
      %p65 = pneg %p59
      %p66 = scmp.eq.s32.totalorder %s12, 1
      %p67 = por %p65, %p66
      %p68 = scmp.ne.s32.totalorder %s60, %s63
      %p69 = scmp.eq.s32.totalorder %s12, 0
      %p70 = por %p68, %p69
      %p71 = scmp.ne.s32.totalorder %s60, %s63
      %p72 = scmp.eq.s32.totalorder %s17, 1
      %p73 = por %p71, %p72
      %p74 = scmp.ne.s32.totalorder %s63, %s64
      %p75 = scmp.eq.s32.totalorder %s17, 0
      %p76 = por %p74, %p75
      %p77 = scmp.ne.s32.totalorder %s63, %s64
      %p78 = scmp.eq.s32.totalorder %s18, 1
      %p79 = por %p77, %p78
      %p81 = scmp.ne.s32.totalorder %s64, %s80
      %p82 = scmp.eq.s32.totalorder %s18, 0
      %p83 = por %p81, %p82
      %s84 = ssub.s32 %s20, %s27
      %p85 = scmp.eq.s32.totalorder %s84, 0
      %s87 = sadd.s32 %s86, 1
      %s88 = scalar_select %p85, %s86, %s87
      %p91 = pneg %p85
      %p92 = scmp.eq.s32.totalorder %s12, 1
      %p93 = por %p91, %p92
      %p94 = scmp.ne.s32.totalorder %s86, %s89
      %p95 = scmp.eq.s32.totalorder %s12, 0
      %p96 = por %p94, %p95
      %p97 = scmp.ne.s32.totalorder %s86, %s89
      %p98 = scmp.eq.s32.totalorder %s17, 1
      %p99 = por %p97, %p98
      %p100 = scmp.ne.s32.totalorder %s89, %s90
      %p101 = scmp.eq.s32.totalorder %s17, 0
      %p102 = por %p100, %p101
      %p103 = scmp.ne.s32.totalorder %s89, %s90
      %p104 = scmp.eq.s32.totalorder %s18, 1
      %p105 = por %p103, %p104
      %p107 = scmp.ne.s32.totalorder %s90, %s106
      %p108 = scmp.eq.s32.totalorder %s18, 0
      %p109 = por %p107, %p108
      %s110 = ssub.s32 %s20, %s27
      %p111 = scmp.eq.s32.totalorder %s110, 0
      %s113 = sadd.s32 %s112, 1
      %s114 = scalar_select %p111, %s112, %s113
      %p117 = pneg %p111
      %p118 = scmp.eq.s32.totalorder %s12, 1
      %p119 = por %p117, %p118
      %p120 = scmp.ne.s32.totalorder %s112, %s115
      %p121 = scmp.eq.s32.totalorder %s12, 0
      %p122 = por %p120, %p121
      %p123 = scmp.ne.s32.totalorder %s112, %s115
      %p124 = scmp.eq.s32.totalorder %s17, 1
      %p125 = por %p123, %p124
      %p126 = scmp.ne.s32.totalorder %s115, %s116
      %p127 = scmp.eq.s32.totalorder %s17, 0
      %p128 = por %p126, %p127
      %p129 = scmp.ne.s32.totalorder %s115, %s116
      %p130 = scmp.eq.s32.totalorder %s18, 1
      %p131 = por %p129, %p130
      %p133 = scmp.ne.s32.totalorder %s116, %s132
      %p134 = scmp.eq.s32.totalorder %s18, 0
      %p135 = por %p133, %p134
      %s136 = ssub.s32 %s19, %s31
      %p137 = scmp.eq.s32.totalorder %s136, 0
      %s139 = sadd.s32 %s138, 1
      %s140 = scalar_select %p137, %s138, %s139
      %p143 = pneg %p137
      %p144 = scmp.eq.s32.totalorder %s12, 1
      %p145 = por %p143, %p144
      %p146 = scmp.ne.s32.totalorder %s138, %s141
      %p147 = scmp.eq.s32.totalorder %s12, 0
      %p148 = por %p146, %p147
      %p149 = scmp.ne.s32.totalorder %s138, %s141
      %p150 = scmp.eq.s32.totalorder %s17, 1
      %p151 = por %p149, %p150
      %p152 = scmp.ne.s32.totalorder %s141, %s142
      %p153 = scmp.eq.s32.totalorder %s17, 0
      %p154 = por %p152, %p153
      %p155 = scmp.ne.s32.totalorder %s141, %s142
      %p156 = scmp.eq.s32.totalorder %s18, 1
      %p157 = por %p155, %p156
      %p159 = scmp.ne.s32.totalorder %s142, %s158
      %p160 = scmp.eq.s32.totalorder %s18, 0
      %p161 = por %p159, %p160
      %p162 = scmp.le.s32.totalorder 1, %s12
      %p163 = scmp.lt.s32.totalorder %s12, 3
      %p164 = pnand %p162, %p163
      %p165 = pneg %p164
      // Predicated region
      $region9: #{mlp_block_apply.1} parent=5 // pred_check
        _
      $region10: #{mlp_block_apply.1} parent=5 // pred_check_branch
        %167 = sbr.rel (%p164) target = $region12
      $region11: #{mlp_block_apply.1} parent=5 // pred_region
        %s168 = ssub.s32 %s12, 1
        // Predicated region
        $region13: #{mlp_block_apply.1} parent=11 // pred_check
          %p169 = pneg %p76
        $region14: #{mlp_block_apply.1} parent=11 // pred_check_branch
          %171 = sbr.rel (%p169) target = $region16
        $region15: #{mlp_block_apply.1} parent=11 // pred_region
          %s173 = ssub.s32 2048, 2048
          %174 = vsyncadd [#allocation5], %s173
          %s175 = smul.addr %s22, 128
          %s176 = scalar_lea.hbm %s1, %s175
          %s177 = sshll.u32 [#allocation4], 4
          %s178 = int_to_ptr.vmem [resolvable:$true] %s177
          %183 = dma.hbm_to_vmem [thread:$0]  %s176, 2048, %s178, [#allocation5], 128, 128, 8
        $region16: #{mlp_block_apply.1} parent=11 // pred_fallthru
          _
        // Predicated region
        $region17: #{mlp_block_apply.1} parent=11 // pred_check
          %p184 = pneg %p102
        $region18: #{mlp_block_apply.1} parent=11 // pred_check_branch
          %186 = sbr.rel (%p184) target = $region20
        $region19: #{mlp_block_apply.1} parent=11 // pred_region
          %s188 = ssub.s32 2048, 2048
          %189 = vsyncadd [#allocation7], %s188
          %s190 = smul.addr %s22, 128
          %s191 = scalar_lea.hbm %s2, %s190
          %s192 = sshll.u32 [#allocation6], 4
          %s193 = int_to_ptr.vmem [resolvable:$true] %s192
          %198 = dma.hbm_to_vmem [thread:$0]  %s191, 2048, %s193, [#allocation7], 128, 128, 8
        $region20: #{mlp_block_apply.1} parent=11 // pred_fallthru
          _
        // Predicated region
        $region21: #{mlp_block_apply.1} parent=11 // pred_check
          %p199 = pneg %p128
        $region22: #{mlp_block_apply.1} parent=11 // pred_check_branch
          %201 = sbr.rel (%p199) target = $region24
        $region23: #{mlp_block_apply.1} parent=11 // pred_region
          %s202 = smul.u32 16, %s22
          %s204 = ssub.s32 2048, 2048
          %205 = vsyncadd [#allocation7], %s204
          %s206 = smul.addr %s202, 128
          %s207 = scalar_lea.hbm %s3, %s206
          %s208 = sshll.u32 [#allocation8], 4
          %s209 = int_to_ptr.vmem [resolvable:$true] %s208
          %214 = dma.hbm_to_vmem [thread:$0]  %s207, 2048, %s209, [#allocation7], 128, 128, 8
        $region24: #{mlp_block_apply.1} parent=11 // pred_fallthru
          _
      $region12: #{mlp_block_apply.1} parent=5 // pred_fallthru
        _
      %p215 = scmp.lt.s32.totalorder %s12, 2
      // Predicated region
      $region25: #{mlp_block_apply.1} parent=5 // pred_check
        %p216 = pneg %p215
      $region26: #{mlp_block_apply.1} parent=5 // pred_check_branch
        %218 = sbr.rel (%p216) target = $region28
      $region27: #{mlp_block_apply.1} parent=5 // pred_region
        // Predicated region
        $region29: #{mlp_block_apply.1} parent=27 // pred_check
          %p219 = pneg %p44
        $region30: #{mlp_block_apply.1} parent=27 // pred_check_branch
          %221 = sbr.rel (%p219) target = $region32
        $region31: #{mlp_block_apply.1} parent=27 // pred_region
          %p222 = scmp.lt.s32.totalorder %s19, 1
          %s223 = scalar_select %p222, %s19, 1
          %s224 = smul.addr %s223, 8
          %s225 = scalar_lea.vmem %s0, %s224
        $region32: #{mlp_block_apply.1} parent=27 // pred_fallthru
          _
      $region28: #{mlp_block_apply.1} parent=5 // pred_fallthru
        _
      %p226 = scmp.le.s32.totalorder 1, %s12
      %p227 = scmp.lt.s32.totalorder %s12, 3
      %p228 = pnand %p226, %p227
      %p229 = pneg %p228
      // Predicated region
      $region33: #{mlp_block_apply.1} parent=5 // pred_check
        _
      $region34: #{mlp_block_apply.1} parent=5 // pred_check_branch
        %231 = sbr.rel (%p228) target = $region36
      $region35: #{mlp_block_apply.1} parent=5 // pred_region
        %s232 = ssub.s32 %s12, 1
        // Predicated region
        $region37: #{mlp_block_apply.1} parent=35 // pred_check
          %p233 = pneg %p76
        $region38: #{mlp_block_apply.1} parent=35 // pred_check_branch
          %235 = sbr.rel (%p233) target = $region40
        $region39: #{mlp_block_apply.1} parent=35 // pred_region
          %236 = dma.done [#allocation5], 2048
        $region40: #{mlp_block_apply.1} parent=35 // pred_fallthru
          _
        // Predicated region
        $region41: #{mlp_block_apply.1} parent=35 // pred_check
          %p237 = pneg %p102
        $region42: #{mlp_block_apply.1} parent=35 // pred_check_branch
          %239 = sbr.rel (%p237) target = $region44
        $region43: #{mlp_block_apply.1} parent=35 // pred_region
          %240 = dma.done [#allocation7], 2048
        $region44: #{mlp_block_apply.1} parent=35 // pred_fallthru
          _
        // Predicated region
        $region45: #{mlp_block_apply.1} parent=35 // pred_check
          %p241 = pneg %p128
        $region46: #{mlp_block_apply.1} parent=35 // pred_check_branch
          %243 = sbr.rel (%p241) target = $region48
        $region47: #{mlp_block_apply.1} parent=35 // pred_region
          %244 = dma.done [#allocation7], 2048
        $region48: #{mlp_block_apply.1} parent=35 // pred_fallthru
          _
        %p245 = scmp.lt.s32.totalorder %s21, 1
        %s246 = scalar_select %p245, %s21, 1
        %s247 = smul.addr %s246, 8
        %s248 = scalar_lea.vmem %s0, %s247
        %p249 = pneg %p50
        %p250 = pneg %p47
        %p251 = pneg %p76
        %p252 = pneg %p73
        %p253 = pneg %p102
        %p254 = pneg %p99
        %p255 = pneg %p128
        %p256 = pneg %p125
        %p257 = pneg %p154
        %p258 = pneg %p151
        %p259 = scmp.lt.s32.totalorder %s21, 1
        %s260 = scalar_select %p259, %s21, 1
        %s261 = smul.addr %s260, 8
        %s262 = scalar_lea.vmem %s4, %s261
        %p263 = scmp.lt.s32.totalorder %s21, 1
        %s264 = scalar_select %p263, %s21, 1
        %s265 = smul.addr %s264, 8
        %s266 = scalar_lea.vmem %s0, %s265
        %s267 = smul.u32 16, %s22
        %p268 = scmp.lt.s32.totalorder %s21, 1
        %s269 = scalar_select %p268, %s21, 1
        %s270 = smul.addr %s269, 8
        %s271 = scalar_lea.vmem %s4, %s270
        %p272 = scmp.eq.s32.totalorder %s22, 0
        // Predicated region
        $region49: #{mlp_block_apply.1} parent=35 // pred_check
          %p273 = pneg %p272
        $region50: #{mlp_block_apply.1} parent=35 // pred_check_branch
          %275 = sbr.rel (%p273) target = $region52
        $region51: #{mlp_block_apply.1} parent=35 // pred_region
          %v276 = vld [vmem:[%s266] sm:$0xff]
          %277 = vadd.xlane.f32.xlu0 %v276
          %v278 = vpop.xlane.xlu0 %277
          %v279 = vmul.f32 %v278, 0.03125
          %v280 = vmul.f32 %v276, %v276
          %281 = vadd.xlane.f32.xlu0 %v280
          %v282 = vpop.xlane.xlu0 %281
          %v283 = vmul.f32 %v282, 0.03125
          %v284 = vmul.f32 %v279, %v279
          %v285 = vsub.f32 %v283, %v284
          %v286 = vsub.f32 %v276, %v279
          %v287 = vadd.f32 %v285, 1e-05
          %v288 = vrsqrt.pop %v287
          %v289 = vmul.f32 %v286, %v288
          %290 = vst [vmem:[#allocation2] sm:$0xff] %v289
          %291 = vst [vmem:[#allocation3] sm:$0xff] 0.0
        $region52: #{mlp_block_apply.1} parent=35 // pred_fallthru
          _
        %v292 = vld [vmem:[#allocation2] sm:$0xff]
        %v293 = vld [vmem:[#allocation4] sm:$0xff]
        %v294 = vld [vmem:[#allocation4 + $0x8] sm:$0xff]
        %v295 = vld [vmem:[#allocation4 + $0x10] sm:$0xff]
        %v296 = vld [vmem:[#allocation4 + $0x18] sm:$0xff]
        %v297 = vld [vmem:[#allocation4 + $0x20] sm:$0xff]
        %v298 = vld [vmem:[#allocation4 + $0x28] sm:$0xff]
        %v299 = vld [vmem:[#allocation4 + $0x30] sm:$0xff]
        %v300 = vld [vmem:[#allocation4 + $0x38] sm:$0xff]
        %v301 = vld [vmem:[#allocation4 + $0x40] sm:$0xff]
        %v302 = vld [vmem:[#allocation4 + $0x48] sm:$0xff]
        %v303 = vld [vmem:[#allocation4 + $0x50] sm:$0xff]
        %v304 = vld [vmem:[#allocation4 + $0x58] sm:$0xff]
        %v305 = vld [vmem:[#allocation4 + $0x60] sm:$0xff]
        %v306 = vld [vmem:[#allocation4 + $0x68] sm:$0xff]
        %v307 = vld [vmem:[#allocation4 + $0x70] sm:$0xff]
        %v308 = vld [vmem:[#allocation4 + $0x78] sm:$0xff]
        %309 = vmatprep.subr.mxu0 0.0
        %310 = vmatpush1.msra.mxu0 %v308
        %311 = vmatprep.subr.mxu0 0.0
        %312 = vmatpush1.msra.mxu0 %v307
        %313 = vmatprep.subr.mxu0 0.0
        %314 = vmatpush1.msra.mxu0 %v306
        %315 = vmatprep.subr.mxu0 0.0
        %316 = vmatpush1.msra.mxu0 %v305
        %317 = vmatprep.subr.mxu0 0.0
        %318 = vmatpush1.msra.mxu0 %v304
        %319 = vmatprep.subr.mxu0 0.0
        %320 = vmatpush1.msra.mxu0 %v303
        %321 = vmatprep.subr.mxu0 0.0
        %322 = vmatpush1.msra.mxu0 %v302
        %323 = vmatprep.subr.mxu0 0.0
        %324 = vmatpush1.msra.mxu0 %v301
        %325 = vmatprep.subr.mxu0 0.0
        %326 = vmatpush1.msra.mxu0 %v300
        %327 = vmatprep.subr.mxu0 0.0
        %328 = vmatpush1.msra.mxu0 %v299
        %329 = vmatprep.subr.mxu0 0.0
        %330 = vmatpush1.msra.mxu0 %v298
        %331 = vmatprep.subr.mxu0 0.0
        %332 = vmatpush1.msra.mxu0 %v297
        %333 = vmatprep.subr.mxu0 0.0
        %334 = vmatpush1.msra.mxu0 %v296
        %335 = vmatprep.subr.mxu0 0.0
        %336 = vmatpush1.msra.mxu0 %v295
        %337 = vmatprep.subr.mxu0 0.0
        %338 = vmatpush1.msra.mxu0 %v294
        %339 = vmatprep.subr.mxu0 0.0
        %340 = vmatpush1.msra.mxu0 %v293
        %341 = vmatprep.subr.mxu0 0.0
        %342 = vmatpush2.msra.mxu0 0.0
        %343 = vmatprep.subr.mxu0 0.0
        %344 = vmatpush2.msra.mxu0 0.0
        %345 = vmatprep.subr.mxu0 0.0
        %346 = vmatpush2.msra.mxu0 0.0
        %347 = vmatprep.subr.mxu0 0.0
        %348 = vmatpush2.msra.mxu0 0.0
        %349 = vmatprep.subr.mxu0 0.0
        %350 = vmatpush2.msra.mxu0 0.0
        %351 = vmatprep.subr.mxu0 0.0
        %352 = vmatpush2.msra.mxu0 0.0
        %353 = vmatprep.subr.mxu0 0.0
        %354 = vmatpush2.msra.mxu0 0.0
        %355 = vmatprep.subr.mxu0 0.0
        %356 = vmatpush2.msra.mxu0 0.0
        %357 = vmatprep.subr.mxu0 0.0
        %358 = vmatpush2.msra.mxu0 0.0
        %359 = vmatprep.subr.mxu0 0.0
        %360 = vmatpush2.msra.mxu0 0.0
        %361 = vmatprep.subr.mxu0 0.0
        %362 = vmatpush2.msra.mxu0 0.0
        %363 = vmatprep.subr.mxu0 0.0
        %364 = vmatpush2.msra.mxu0 0.0
        %365 = vmatprep.subr.mxu0 0.0
        %366 = vmatpush2.msra.mxu0 0.0
        %367 = vmatprep.subr.mxu0 0.0
        %368 = vmatpush2.msra.mxu0 0.0
        %369 = vmatprep.subr.mxu0 0.0
        %370 = vmatpush2.msra.mxu0 0.0
        %371 = vmatprep.subr.mxu0 0.0
        %372 = vmatpush2.msra.mxu0 0.0
        %373 = vmatprep.mubr.f32.mxu0 0.0
        %374 = vmatmul.mubr.f32.gmra.mxu0 %v292
        %v375 = vpop.f32.mrf.mxu0
        %v376 = vadd.f32 0.0, %v375
        %v377 = vpop.f32.mrf.mxu0
        %378 = vdwg.mxu0
        %v379 = vld [vmem:[#allocation6] sm:$0xff]
        %v380 = vld [vmem:[#allocation6 + $0x8] sm:$0xff]
        %v381 = vld [vmem:[#allocation6 + $0x10] sm:$0xff]
        %v382 = vld [vmem:[#allocation6 + $0x18] sm:$0xff]
        %v383 = vld [vmem:[#allocation6 + $0x20] sm:$0xff]
        %v384 = vld [vmem:[#allocation6 + $0x28] sm:$0xff]
        %v385 = vld [vmem:[#allocation6 + $0x30] sm:$0xff]
        %v386 = vld [vmem:[#allocation6 + $0x38] sm:$0xff]
        %v387 = vld [vmem:[#allocation6 + $0x40] sm:$0xff]
        %v388 = vld [vmem:[#allocation6 + $0x48] sm:$0xff]
        %v389 = vld [vmem:[#allocation6 + $0x50] sm:$0xff]
        %v390 = vld [vmem:[#allocation6 + $0x58] sm:$0xff]
        %v391 = vld [vmem:[#allocation6 + $0x60] sm:$0xff]
        %v392 = vld [vmem:[#allocation6 + $0x68] sm:$0xff]
        %v393 = vld [vmem:[#allocation6 + $0x70] sm:$0xff]
        %v394 = vld [vmem:[#allocation6 + $0x78] sm:$0xff]
        %395 = vmatprep.subr.mxu0 0.0
        %396 = vmatpush1.msra.mxu0 %v394
        %397 = vmatprep.subr.mxu0 0.0
        %398 = vmatpush1.msra.mxu0 %v393
        %399 = vmatprep.subr.mxu0 0.0
        %400 = vmatpush1.msra.mxu0 %v392
        %401 = vmatprep.subr.mxu0 0.0
        %402 = vmatpush1.msra.mxu0 %v391
        %403 = vmatprep.subr.mxu0 0.0
        %404 = vmatpush1.msra.mxu0 %v390
        %405 = vmatprep.subr.mxu0 0.0
        %406 = vmatpush1.msra.mxu0 %v389
        %407 = vmatprep.subr.mxu0 0.0
        %408 = vmatpush1.msra.mxu0 %v388
        %409 = vmatprep.subr.mxu0 0.0
        %410 = vmatpush1.msra.mxu0 %v387
        %411 = vmatprep.subr.mxu0 0.0
        %412 = vmatpush1.msra.mxu0 %v386
        %413 = vmatprep.subr.mxu0 0.0
        %414 = vmatpush1.msra.mxu0 %v385
        %415 = vmatprep.subr.mxu0 0.0
        %416 = vmatpush1.msra.mxu0 %v384
        %417 = vmatprep.subr.mxu0 0.0
        %418 = vmatpush1.msra.mxu0 %v383
        %419 = vmatprep.subr.mxu0 0.0
        %420 = vmatpush1.msra.mxu0 %v382
        %421 = vmatprep.subr.mxu0 0.0
        %422 = vmatpush1.msra.mxu0 %v381
        %423 = vmatprep.subr.mxu0 0.0
        %424 = vmatpush1.msra.mxu0 %v380
        %425 = vmatprep.subr.mxu0 0.0
        %426 = vmatpush1.msra.mxu0 %v379
        %427 = vmatprep.subr.mxu0 0.0
        %428 = vmatpush2.msra.mxu0 0.0
        %429 = vmatprep.subr.mxu0 0.0
        %430 = vmatpush2.msra.mxu0 0.0
        %431 = vmatprep.subr.mxu0 0.0
        %432 = vmatpush2.msra.mxu0 0.0
        %433 = vmatprep.subr.mxu0 0.0
        %434 = vmatpush2.msra.mxu0 0.0
        %435 = vmatprep.subr.mxu0 0.0
        %436 = vmatpush2.msra.mxu0 0.0
        %437 = vmatprep.subr.mxu0 0.0
        %438 = vmatpush2.msra.mxu0 0.0
        %439 = vmatprep.subr.mxu0 0.0
        %440 = vmatpush2.msra.mxu0 0.0
        %441 = vmatprep.subr.mxu0 0.0
        %442 = vmatpush2.msra.mxu0 0.0
        %443 = vmatprep.subr.mxu0 0.0
        %444 = vmatpush2.msra.mxu0 0.0
        %445 = vmatprep.subr.mxu0 0.0
        %446 = vmatpush2.msra.mxu0 0.0
        %447 = vmatprep.subr.mxu0 0.0
        %448 = vmatpush2.msra.mxu0 0.0
        %449 = vmatprep.subr.mxu0 0.0
        %450 = vmatpush2.msra.mxu0 0.0
        %451 = vmatprep.subr.mxu0 0.0
        %452 = vmatpush2.msra.mxu0 0.0
        %453 = vmatprep.subr.mxu0 0.0
        %454 = vmatpush2.msra.mxu0 0.0
        %455 = vmatprep.subr.mxu0 0.0
        %456 = vmatpush2.msra.mxu0 0.0
        %457 = vmatprep.subr.mxu0 0.0
        %458 = vmatpush2.msra.mxu0 0.0
        %459 = vmatprep.mubr.f32.mxu0 0.0
        %460 = vmatmul.mubr.f32.gmra.mxu0 %v292
        %v461 = vpop.f32.mrf.mxu0
        %v462 = vadd.f32 0.0, %v461
        %v463 = vpop.f32.mrf.mxu0
        %464 = vdwg.mxu0
        %v465 = vxor.u32 %v462, 2147483648
        %v466 = vmul.f32 %v465, 1.442695
        %v467 = vpow.pop %v466
        %v468 = vadd.f32 %v467, 1.0
        %v469 = vrcp.pop %v468
        %v470 = vmul.f32 1.0, %v469
        %v471 = vmul.f32 %v462, %v470
        %v472 = vmul.f32 %v376, %v471
        %v473 = vld [vmem:[#allocation3] sm:$0xff]
        %v474 = vld [vmem:[#allocation8] sm:$0xff]
        %v475 = vld [vmem:[#allocation8 + $0x8] sm:$0xff]
        %v476 = vld [vmem:[#allocation8 + $0x10] sm:$0xff]
        %v477 = vld [vmem:[#allocation8 + $0x18] sm:$0xff]
        %v478 = vld [vmem:[#allocation8 + $0x20] sm:$0xff]
        %v479 = vld [vmem:[#allocation8 + $0x28] sm:$0xff]
        %v480 = vld [vmem:[#allocation8 + $0x30] sm:$0xff]
        %v481 = vld [vmem:[#allocation8 + $0x38] sm:$0xff]
        %v482 = vld [vmem:[#allocation8 + $0x40] sm:$0xff]
        %v483 = vld [vmem:[#allocation8 + $0x48] sm:$0xff]
        %v484 = vld [vmem:[#allocation8 + $0x50] sm:$0xff]
        %v485 = vld [vmem:[#allocation8 + $0x58] sm:$0xff]
        %v486 = vld [vmem:[#allocation8 + $0x60] sm:$0xff]
        %v487 = vld [vmem:[#allocation8 + $0x68] sm:$0xff]
        %v488 = vld [vmem:[#allocation8 + $0x70] sm:$0xff]
        %v489 = vld [vmem:[#allocation8 + $0x78] sm:$0xff]
        %490 = vmatprep.subr.mxu0 0.0
        %491 = vmatpush1.msra.mxu0 %v489
        %492 = vmatprep.subr.mxu0 0.0
        %493 = vmatpush1.msra.mxu0 %v488
        %494 = vmatprep.subr.mxu0 0.0
        %495 = vmatpush1.msra.mxu0 %v487
        %496 = vmatprep.subr.mxu0 0.0
        %497 = vmatpush1.msra.mxu0 %v486
        %498 = vmatprep.subr.mxu0 0.0
        %499 = vmatpush1.msra.mxu0 %v485
        %500 = vmatprep.subr.mxu0 0.0
        %501 = vmatpush1.msra.mxu0 %v484
        %502 = vmatprep.subr.mxu0 0.0
        %503 = vmatpush1.msra.mxu0 %v483
        %504 = vmatprep.subr.mxu0 0.0
        %505 = vmatpush1.msra.mxu0 %v482
        %506 = vmatprep.subr.mxu0 0.0
        %507 = vmatpush1.msra.mxu0 %v481
        %508 = vmatprep.subr.mxu0 0.0
        %509 = vmatpush1.msra.mxu0 %v480
        %510 = vmatprep.subr.mxu0 0.0
        %511 = vmatpush1.msra.mxu0 %v479
        %512 = vmatprep.subr.mxu0 0.0
        %513 = vmatpush1.msra.mxu0 %v478
        %514 = vmatprep.subr.mxu0 0.0
        %515 = vmatpush1.msra.mxu0 %v477
        %516 = vmatprep.subr.mxu0 0.0
        %517 = vmatpush1.msra.mxu0 %v476
        %518 = vmatprep.subr.mxu0 0.0
        %519 = vmatpush1.msra.mxu0 %v475
        %520 = vmatprep.subr.mxu0 0.0
        %521 = vmatpush1.msra.mxu0 %v474
        %522 = vmatprep.subr.mxu0 0.0
        %523 = vmatpush2.msra.mxu0 0.0
        %524 = vmatprep.subr.mxu0 0.0
        %525 = vmatpush2.msra.mxu0 0.0
        %526 = vmatprep.subr.mxu0 0.0
        %527 = vmatpush2.msra.mxu0 0.0
        %528 = vmatprep.subr.mxu0 0.0
        %529 = vmatpush2.msra.mxu0 0.0
        %530 = vmatprep.subr.mxu0 0.0
        %531 = vmatpush2.msra.mxu0 0.0
        %532 = vmatprep.subr.mxu0 0.0
        %533 = vmatpush2.msra.mxu0 0.0
        %534 = vmatprep.subr.mxu0 0.0
        %535 = vmatpush2.msra.mxu0 0.0
        %536 = vmatprep.subr.mxu0 0.0
        %537 = vmatpush2.msra.mxu0 0.0
        %538 = vmatprep.subr.mxu0 0.0
        %539 = vmatpush2.msra.mxu0 0.0
        %540 = vmatprep.subr.mxu0 0.0
        %541 = vmatpush2.msra.mxu0 0.0
        %542 = vmatprep.subr.mxu0 0.0
        %543 = vmatpush2.msra.mxu0 0.0
        %544 = vmatprep.subr.mxu0 0.0
        %545 = vmatpush2.msra.mxu0 0.0
        %546 = vmatprep.subr.mxu0 0.0
        %547 = vmatpush2.msra.mxu0 0.0
        %548 = vmatprep.subr.mxu0 0.0
        %549 = vmatpush2.msra.mxu0 0.0
        %550 = vmatprep.subr.mxu0 0.0
        %551 = vmatpush2.msra.mxu0 0.0
        %552 = vmatprep.subr.mxu0 0.0
        %553 = vmatpush2.msra.mxu0 0.0
        %554 = vmatprep.mubr.f32.mxu0 0.0
        %555 = vmatmul.mubr.f32.gmra.mxu0 %v472
        %v556 = vpop.f32.mrf.mxu0
        %v557 = vadd.f32 0.0, %v556
        %v558 = vpop.f32.mrf.mxu0
        %559 = vdwg.mxu0
        %v560 = vadd.f32 %v473, %v557
        %561 = vst [vmem:[#allocation3] sm:$0xff] %v560
        // Predicated region
        $region53: #{mlp_block_apply.1} parent=35 // pred_check
          %p562 = pneg %p272
        $region54: #{mlp_block_apply.1} parent=35 // pred_check_branch
          %564 = sbr.rel (%p562) target = $region56
        $region55: #{mlp_block_apply.1} parent=35 // pred_region
          %v565 = vld [vmem:[#allocation3] sm:$0xff]
          %v566 = vld [vmem:[%s266] sm:$0xff]
          %v567 = vadd.f32 %v565, %v566
          %568 = vst [vmem:[%s271] sm:$0xff] %v567
        $region56: #{mlp_block_apply.1} parent=35 // pred_fallthru
          _
        %p569 = scmp.lt.s32.totalorder %s21, 1
        %s570 = scalar_select %p569, %s21, 1
        %s571 = smul.addr %s570, 8
        %s572 = scalar_lea.vmem %s4, %s571
        // Predicated region
        $region57: #{mlp_block_apply.1} parent=35 // pred_check
          %p573 = pneg %p151
        $region58: #{mlp_block_apply.1} parent=35 // pred_check_branch
          %575 = sbr.rel (%p573) target = $region60
        $region59: #{mlp_block_apply.1} parent=35 // pred_region
          _
        $region60: #{mlp_block_apply.1} parent=35 // pred_fallthru
          _
      $region36: #{mlp_block_apply.1} parent=5 // pred_fallthru
        _
      %p576 = scmp.le.s32.totalorder 2, %s12
      // Predicated region
      $region61: #{mlp_block_apply.1} parent=5 // pred_check
        %p577 = pneg %p576
      $region62: #{mlp_block_apply.1} parent=5 // pred_check_branch
        %579 = sbr.rel (%p577) target = $region64
      $region63: #{mlp_block_apply.1} parent=5 // pred_region
        %s580 = ssub.s32 %s12, 2
        // Predicated region
        $region65: #{mlp_block_apply.1} parent=63 // pred_check
          %p581 = pneg %p157
        $region66: #{mlp_block_apply.1} parent=63 // pred_check_branch
          %583 = sbr.rel (%p581) target = $region68
        $region67: #{mlp_block_apply.1} parent=63 // pred_region
          %p584 = scmp.lt.s32.totalorder %s23, 1
          %s585 = scalar_select %p584, %s23, 1
          %s586 = smul.addr %s585, 8
          %s587 = scalar_lea.vmem %s4, %s586
        $region68: #{mlp_block_apply.1} parent=63 // pred_fallthru
          _
      $region64: #{mlp_block_apply.1} parent=5 // pred_fallthru
        _
    $region6: #{mlp_block_apply.1} parent=1 // loop_footer
      %s16 = sadd.s32 1, %s12
    $region7: #{mlp_block_apply.1} parent=1 // loop_footer_branch
      %11 = sbr.rel target = $region3
    $region8: #{mlp_block_apply.1} parent=1 // loop_exit
      _
    %588 = vsyncpa [#allocation5], 1
    %s589 = scalar_lea.sflag [#allocation5], 1
    %590 = vsyncpa %s589, 1
    %591 = vsyncpa [#allocation7], 1

</llo_original>
